<compile_context>
chip_gen: v6e
topology: v6e:2x2x1
jax: 0.10.0
libtpu: 0.0.40
codegen_flags: <defaults>
</compile_context>

<pallas_src>
import jax
import jax.numpy as jnp
from jax.experimental import pallas as pl
from jax.experimental.pallas import tpu as pltpu


# ----------------------------------------------------------------------------
# Deterministic parameter init (mirrors UniversalSpectralFilter.__init__)
# ----------------------------------------------------------------------------
FILTER_PATTERNS = {
    'smooth':      [1.0, -0.5, 0.1, -0.02, 0.004, -0.0008, 0.00015],
    'sharp':       [0.3, 0.1, 0.1, 0.2, 0.4, 0.6, 0.8],
    'bandpass':    [0.1, 0.2, 0.8, 1.0, 0.8, 0.2, 0.1],
    'golden_036':  [1.0, -0.36, 0.1296, -0.22, 0.1564, -0.088, 0.0548],
    'butterworth': [1.0, -0.6, 0.2, -0.05, 0.01, -0.002, 0.0003],
    'gaussian':    [1.0, -0.7, 0.15, -0.03, 0.005, -0.0007, 8e-05],
    'band_stop':   [1.0, -0.8, 0.3, -0.7, 0.4, -0.1, 0.05],
    'notch':       [1.0, -0.2, -0.3, 0.6, -0.4, 0.15, -0.05],
}


def init_coeffs(filter_order=6, init_filter_name='smooth'):
    """Replicates the nn.Parameter init: first (filter_order+1) pattern coeffs,
    zero-padded if the pattern is shorter."""
    pattern = FILTER_PATTERNS[init_filter_name]
    coeffs = [0.0] * (filter_order + 1)
    for i, v in enumerate(pattern[: filter_order + 1]):
        coeffs[i] = v
    return jnp.asarray(coeffs, dtype=jnp.float32)


LANES = 128
MAX_BLOCK_ROWS = 4096     # 4096 * 128 * 4 B = 2 MiB per block buffer


# ----------------------------------------------------------------------------
# Pallas kernel
# ----------------------------------------------------------------------------
def _usf_kernel(coeffs_ref, scale_ref, eig_ref, out_ref):
    # coeffs_ref : SMEM f32[K]                 (K = filter_order + 1)
    # scale_ref  : SMEM f32[1]                 (2 / (max(eig) + 1e-8), precomputed)
    # eig_ref    : VMEM f32[block_rows, 128]   (current tile of eigenvalues)
    # out_ref    : VMEM f32[block_rows, 128]
    x = eig_ref[...] * scale_ref[0] - 1.0      # map to [-1, 1]
    two_x = x + x                              # hoisted 2*x

    k = coeffs_ref.shape[0]                    # static
    # Clenshaw recurrence for sum_i c_i T_i(x):
    #   b_{K+1} = b_{K+2} = 0
    #   b_i = c_i + 2x*b_{i+1} - b_{i+2}   (i = K .. 1)
    #   f(x) = c_0 + x*b_1 - b_2
    # TODO(synk): on v7x (where ~25 VALU ops/elem becomes the binding slot at
    # 3.2 TB/s HBM) a monomial-basis Horner with scale/shift folded into
    # SMEM-precomputed coefficients cuts this to ~16 ops/elem, but the
    # Chebyshev->monomial basis change needs rounding re-validation at degree
    # 6, so the numerically-stable Clenshaw form is kept here.
    if k == 1:
        result = jnp.full_like(x, coeffs_ref[0])
    else:
        b1 = jnp.full_like(x, coeffs_ref[k - 1])
        b2 = jnp.zeros_like(x)
        for i in range(k - 2, 0, -1):          # static unroll (k is small)
            b1, b2 = coeffs_ref[i] + two_x * b1 - b2, b1
        result = coeffs_ref[0] + x * b1 - b2

    # exp(-clamp(|result|, max=10)) + 1e-6   (exp -> EUP slot)
    out_ref[...] = jnp.exp(-jnp.minimum(jnp.abs(result), 10.0)) + 1e-6


# ----------------------------------------------------------------------------
# Tiling helpers (all static Python math on shapes)
# ----------------------------------------------------------------------------
def _cdiv(a, b):
    return -(-a // b)


def _round_up(a, b):
    return _cdiv(a, b) * b


def _choose_tiling(rows):
    """Returns (block_rows, grid_len).  block_rows is a multiple of 8 (or the
    full row count for tiny inputs); grid uses cdiv so the last block may be
    clipped by Pallas (safe: elementwise kernel, OOB writes are dropped)."""
    if rows < 16:
        return rows, 1                          # single full block
    # At least 2 (even) blocks so both v7x TensorCores get balanced work,
    # each block capped at 2 MiB (MAX_BLOCK_ROWS) for v5e's 16 MiB VMEM.
    num_blocks = max(2, _cdiv(rows, MAX_BLOCK_ROWS))
    if num_blocks % 2:
        num_blocks += 1
    block_rows = _round_up(_cdiv(rows, num_blocks), 8)
    return block_rows, _cdiv(rows, block_rows)


# ----------------------------------------------------------------------------
# Wrapper
# ----------------------------------------------------------------------------
@jax.jit
def universal_spectral_filter(eigenvalues, coeffs):
    """eigenvalues: f32[N] (1-D, like torch).  coeffs: f32[K].  Returns f32[N]."""
    eigenvalues = eigenvalues.astype(jnp.float32)
    coeffs = coeffs.astype(jnp.float32)
    n = eigenvalues.shape[0]

    # Global max / scale outside the kernel (tiny XLA reduce); the kernel is
    # then purely elementwise -> tiles stream independently.
    scale = (2.0 / (jnp.max(eigenvalues) + 1e-8)).reshape(1)

    rows = _cdiv(n, LANES)
    n2d = rows * LANES
    if n2d == n:
        # Fast path: reshape is a free row-major bitcast, no pad/slice traffic.
        eig2d = eigenvalues.reshape(rows, LANES)
    else:
        # TODO(synk): accept pre-padded (multiple-of-128) eigenvalues upstream
        # to avoid this full-array pad/slice HBM round-trip for ragged N.
        eig2d = jnp.pad(eigenvalues, (0, n2d - n)).reshape(rows, LANES)

    block_rows, grid_len = _choose_tiling(rows)

    k = coeffs.shape[0]
    flops = (3 * max(k - 1, 0) + 9) * n2d       # Clenshaw + map + epilogue

    out2d = pl.pallas_call(
        _usf_kernel,
        out_shape=jax.ShapeDtypeStruct((rows, LANES), jnp.float32),
        grid=(grid_len,),
        in_specs=[
            pl.BlockSpec(memory_space=pltpu.MemorySpace.SMEM),    # coeffs
            pl.BlockSpec(memory_space=pltpu.MemorySpace.SMEM),    # scale
            pl.BlockSpec((block_rows, LANES), lambda i: (i, 0)),  # eig tiles
        ],
        out_specs=pl.BlockSpec((block_rows, LANES), lambda i: (i, 0)),
        compiler_params=pltpu.CompilerParams(
            dimension_semantics=("parallel",)),
        cost_estimate=pl.CostEstimate(
            flops=flops, transcendentals=n2d, bytes_accessed=8 * n2d),
    )(coeffs, scale, eig2d)

    out = out2d.reshape(n2d)
    return out if n2d == n else out[:n]


# ----------------------------------------------------------------------------
# Pure-JAX reference (mirrors the PyTorch forward) for a sanity check
# ----------------------------------------------------------------------------
def _reference(eigenvalues, coeffs):
    max_eig = jnp.max(eigenvalues) + 1e-8
    x = 2.0 * (eigenvalues / max_eig) - 1.0
    result = coeffs[0] * jnp.ones_like(x)
    if coeffs.shape[0] > 1:
        t_prev, t_curr = jnp.ones_like(x), x
        result = result + coeffs[1] * t_curr
        for i in range(2, coeffs.shape[0]):
            t_next = 2.0 * x * t_curr - t_prev
            result = result + coeffs[i] * t_next
            t_prev, t_curr = t_curr, t_next
    return jnp.exp(-jnp.minimum(jnp.abs(result), 10.0)) + 1e-6


if __name__ == "__main__":
    key = jax.random.PRNGKey(0)
    k1, k2, k3, k4 = jax.random.split(key, 4)
    coeffs = init_coeffs(filter_order=6, init_filter_name='smooth')

    # Case 1: small ragged N (pad path, single full-rows block).
    n1 = 200
    eig1 = jax.random.uniform(k1, (n1,), dtype=jnp.float32) * 2.0
    out1 = jax.block_until_ready(universal_spectral_filter(eig1, coeffs))
    assert out1.shape == (n1,)
    assert jnp.allclose(out1, _reference(eig1, coeffs), atol=1e-5, rtol=1e-5)

    # Case 2: N multiple of 128, rows < 16 (fast path: no pad, single block).
    n2 = 1280
    eig2 = jax.random.uniform(k2, (n2,), dtype=jnp.float32) * 2.0
    out2 = jax.block_until_ready(universal_spectral_filter(eig2, coeffs))
    assert out2.shape == (n2,)
    assert jnp.allclose(out2, _reference(eig2, coeffs), atol=1e-5, rtol=1e-5)

    # Case 3: N multiple of 128, rows >= 16 (fast path, 2 evenly split blocks).
    n3 = 4096
    eig3 = jax.random.uniform(k3, (n3,), dtype=jnp.float32) * 2.0
    out3 = jax.block_until_ready(universal_spectral_filter(eig3, coeffs))
    assert out3.shape == (n3,)
    assert jnp.allclose(out3, _reference(eig3, coeffs), atol=1e-5, rtol=1e-5)

    # Case 4: larger ragged N (minimal pad, 2 blocks, clipped last block).
    n4 = 70_000
    eig4 = jax.random.uniform(k4, (n4,), dtype=jnp.float32) * 2.0
    out4 = jax.block_until_ready(universal_spectral_filter(eig4, coeffs))
    assert out4.shape == (n4,)
    assert jnp.allclose(out4, _reference(eig4, coeffs), atol=1e-5, rtol=1e-5)

    print("KERNEL_OK")
</pallas_src>

<mosaic_0001>
module attributes {stable_mosaic.version = 11 : i64} {
  func.func @_usf_kernel(%arg0: i32, %arg1: memref<7xf32, #tpu.memory_space<smem>>, %arg2: memref<1xf32, #tpu.memory_space<smem>>, %arg3: memref<2x128xf32, #tpu.memory_space<vmem>>, %arg4: memref<2x128xf32, #tpu.memory_space<vmem>>) attributes {dimension_semantics = [#tpu.dimension_semantics<parallel>], iteration_bounds = array<i64: 1>, scalar_prefetch = 0 : i64, scratch_operands = 0 : i64, tpu.core_type = #tpu.core_type<tc>, window_params = [{transform_indices = @transform_0, window_bounds = array<i64: 7>}, {transform_indices = @transform_1, window_bounds = array<i64: 1>}, {transform_indices = @transform_2, window_bounds = array<i64: 2, 128>}, {transform_indices = @transform_3, window_bounds = array<i64: 2, 128>}]} {
    %c0 = arith.constant 0 : index
    %c0_0 = arith.constant 0 : index
    %0 = vector.load %arg3[%c0, %c0_0] : memref<2x128xf32, #tpu.memory_space<vmem>>, vector<2x128xf32>
    %c0_1 = arith.constant 0 : index
    %1 = memref.load %arg2[%c0_1] : memref<1xf32, #tpu.memory_space<smem>>
    %2 = vector.broadcast %1 : f32 to vector<2x128xf32>
    %3 = arith.mulf %0, %2 : vector<2x128xf32>
    %cst = arith.constant 1.000000e+00 : f32
    %4 = vector.broadcast %cst : f32 to vector<2x128xf32>
    %5 = arith.subf %3, %4 : vector<2x128xf32>
    %6 = arith.addf %5, %5 : vector<2x128xf32>
    %c6 = arith.constant 6 : index
    %7 = memref.load %arg1[%c6] : memref<7xf32, #tpu.memory_space<smem>>
    %8 = vector.broadcast %7 : f32 to vector<2x128xf32>
    %cst_2 = arith.constant 0.000000e+00 : f32
    %9 = vector.broadcast %cst_2 : f32 to vector<2x128xf32>
    %c5 = arith.constant 5 : index
    %10 = memref.load %arg1[%c5] : memref<7xf32, #tpu.memory_space<smem>>
    %11 = arith.mulf %6, %8 : vector<2x128xf32>
    %12 = vector.broadcast %10 : f32 to vector<2x128xf32>
    %13 = arith.addf %12, %11 : vector<2x128xf32>
    %14 = arith.subf %13, %9 : vector<2x128xf32>
    %c4 = arith.constant 4 : index
    %15 = memref.load %arg1[%c4] : memref<7xf32, #tpu.memory_space<smem>>
    %16 = arith.mulf %6, %14 : vector<2x128xf32>
    %17 = vector.broadcast %15 : f32 to vector<2x128xf32>
    %18 = arith.addf %17, %16 : vector<2x128xf32>
    %19 = arith.subf %18, %8 : vector<2x128xf32>
    %c3 = arith.constant 3 : index
    %20 = memref.load %arg1[%c3] : memref<7xf32, #tpu.memory_space<smem>>
    %21 = arith.mulf %6, %19 : vector<2x128xf32>
    %22 = vector.broadcast %20 : f32 to vector<2x128xf32>
    %23 = arith.addf %22, %21 : vector<2x128xf32>
    %24 = arith.subf %23, %14 : vector<2x128xf32>
    %c2 = arith.constant 2 : index
    %25 = memref.load %arg1[%c2] : memref<7xf32, #tpu.memory_space<smem>>
    %26 = arith.mulf %6, %24 : vector<2x128xf32>
    %27 = vector.broadcast %25 : f32 to vector<2x128xf32>
    %28 = arith.addf %27, %26 : vector<2x128xf32>
    %29 = arith.subf %28, %19 : vector<2x128xf32>
    %c1 = arith.constant 1 : index
    %30 = memref.load %arg1[%c1] : memref<7xf32, #tpu.memory_space<smem>>
    %31 = arith.mulf %6, %29 : vector<2x128xf32>
    %32 = vector.broadcast %30 : f32 to vector<2x128xf32>
    %33 = arith.addf %32, %31 : vector<2x128xf32>
    %34 = arith.subf %33, %24 : vector<2x128xf32>
    %c0_3 = arith.constant 0 : index
    %35 = memref.load %arg1[%c0_3] : memref<7xf32, #tpu.memory_space<smem>>
    %36 = arith.mulf %5, %34 : vector<2x128xf32>
    %37 = vector.broadcast %35 : f32 to vector<2x128xf32>
    %38 = arith.addf %37, %36 : vector<2x128xf32>
    %39 = arith.subf %38, %29 : vector<2x128xf32>
    %40 = math.absf %39 : vector<2x128xf32>
    %cst_4 = arith.constant 1.000000e+01 : f32
    %41 = vector.broadcast %cst_4 : f32 to vector<2x128xf32>
    %42 = arith.minimumf %40, %41 : vector<2x128xf32>
    %cst_5 = arith.constant 0.000000e+00 : f32
    %43 = vector.broadcast %cst_5 : f32 to vector<2x128xf32>
    %44 = arith.subf %43, %42 : vector<2x128xf32>
    %45 = math.exp %44 : vector<2x128xf32>
    %cst_6 = arith.constant 9.99999997E-7 : f32
    %46 = vector.broadcast %cst_6 : f32 to vector<2x128xf32>
    %47 = arith.addf %45, %46 : vector<2x128xf32>
    %c0_7 = arith.constant 0 : index
    %c0_8 = arith.constant 0 : index
    %48 = vector.load %arg4[%c0_7, %c0_8] : memref<2x128xf32, #tpu.memory_space<vmem>>, vector<2x128xf32>
    tpu.vector_store %arg4[%c0_7, %c0_8], %47 {strides = array<i32>} : memref<2x128xf32, #tpu.memory_space<vmem>>, vector<2x128xf32>,
    return
  }
  func.func @transform_0(%arg0: i32) -> i32 {
    %c0_i32 = arith.constant 0 : i32
    %c0_i32_0 = arith.constant 0 : i32
    return %c0_i32 : i32
  }
  func.func @transform_1(%arg0: i32) -> i32 {
    %c0_i32 = arith.constant 0 : i32
    %c0_i32_0 = arith.constant 0 : i32
    return %c0_i32 : i32
  }
  func.func @transform_2(%arg0: i32) -> (i32, i32) {
    %c0_i32 = arith.constant 0 : i32
    %c0_i32_0 = arith.constant 0 : i32
    return %arg0, %c0_i32 : i32, i32
  }
  func.func @transform_3(%arg0: i32) -> (i32, i32) {
    %c0_i32 = arith.constant 0 : i32
    %c0_i32_0 = arith.constant 0 : i32
    return %arg0, %c0_i32 : i32, i32
  }
}

</mosaic_0001>

<llo_original>
// kernel: universal_spectral_filter.1
$region0: #{universal_spectral_filter.1}
  #allocation0 [shape = 'u32[]', space=smem, size = 0x4, offset = 0x4, fixed_abs, tag = 'smem constant byte address 0x4 - core index']
  #allocation1 [shape = 'u32[144,128]{1,0:T(1,128)}', space=vmem, size = 0x12000, scoped, tag = 'internal scratch']
  #allocation2 [shape = 'f32[1]{0:T(128)S(6)}', space=smem, size = 0x200, scoped, tag = 'scoped memory for universal_spectral_filter.1']
  %s0 = inlined_call_operand.vmem [shape: f32[7], index: 0, kind: input, shape index: {}]
  %s1 = inlined_call_operand.<no memory space> [shape: f32[1], index: 1, kind: input, shape index: {}]
  %s2 = inlined_call_operand.vmem [shape: f32[2,128], index: 2, kind: input, shape index: {}]
  %s3 = inlined_call_operand.hbm [shape: f32[2,128], index: 3, kind: output, shape index: {}]
  %s4 = sld [smem:[#allocation0]]
  $region26: #{universal_spectral_filter.1} parent=0
    _
  %s6 = ssub.s32 1, %s4
  %s7 = scalar_select 0, %s6, %s4
  %8 = sst [smem:[#allocation2]] %s1
  $region1: #{universal_spectral_filter.1} parent=0
    #allocation3 [shape = 'u8[512]{0}', space=smem, size = 0x200, scoped, tag = 'input window, operand 0, single buffered']
    #allocation4 [shape = 's32[1]{0}', space=sflag, size = 0x4, scoped, tag = 'scoped memory for universal_spectral_filter.1']
    #allocation5 [shape = 's32[1]{0}', space=sflag, size = 0x4, scoped, tag = 'scoped memory for universal_spectral_filter.1']
    #allocation6 [shape = 'u8[1024]{0}', space=vmem, size = 0x400, scoped, tag = 'output window, operand 0, single buffered']
    %9 = vsyncpa [#allocation5], 0
    %10 = vsyncpa [#allocation4], 0
    // Predicated region
    $region2: #{universal_spectral_filter.1} parent=1 // pred_check
      _
    $region3: #{universal_spectral_filter.1} parent=1 // pred_check_branch
      %12 = sbr.rel (0) target = $region5
    $region4: #{universal_spectral_filter.1} parent=1 // pred_region
      %s14 = ssub.s32 16, 16
      %15 = vsyncadd [#allocation5], %s14
      %s17 = sshll.u32 %s0, 4
      %s18 = int_to_ptr.vmem [resolvable:$true] %s17
      %20 = dma.vmem_to_smem %s18, 16, [#allocation3], [#allocation5]
    $region5: #{universal_spectral_filter.1} parent=1 // pred_fallthru
      _
    // Predicated region
    $region6: #{universal_spectral_filter.1} parent=1 // pred_check
      _
    $region7: #{universal_spectral_filter.1} parent=1 // pred_check_branch
      %22 = sbr.rel (0) target = $region9
    $region8: #{universal_spectral_filter.1} parent=1 // pred_region
      _
    $region9: #{universal_spectral_filter.1} parent=1 // pred_fallthru
      _
    // Predicated region
    $region10: #{universal_spectral_filter.1} parent=1 // pred_check
      _
    $region11: #{universal_spectral_filter.1} parent=1 // pred_check_branch
      %24 = sbr.rel (0) target = $region13
    $region12: #{universal_spectral_filter.1} parent=1 // pred_region
      _
    $region13: #{universal_spectral_filter.1} parent=1 // pred_fallthru
      _
    // Predicated region
    $region14: #{universal_spectral_filter.1} parent=1 // pred_check
      _
    $region15: #{universal_spectral_filter.1} parent=1 // pred_check_branch
      %26 = sbr.rel (0) target = $region17
    $region16: #{universal_spectral_filter.1} parent=1 // pred_region
      %27 = dma.done [#allocation5], 16
    $region17: #{universal_spectral_filter.1} parent=1 // pred_fallthru
      _
    %28 = sfence
    %v29 = vld [vmem:[%s2] sm:$0x3]
    %s30 = sld [smem:[#allocation2]]
    %v31 = vstv %s30
    %v32 = vmul.f32 %v29, %v31
    %v33 = vsub.f32 %v32, 1.0
    %v34 = vadd.f32 %v33, %v33
    %s35 = sld [smem:[#allocation3 + $0x6]]
    %v36 = vstv %s35
    %s37 = sld [smem:[#allocation3 + $0x5]]
    %v38 = vmul.f32 %v34, %v36
    %v39 = vstv %s37
    %v40 = vadd.f32 %v39, %v38
    %s41 = sld [smem:[#allocation3 + $0x4]]
    %v42 = vmul.f32 %v34, %v40
    %v43 = vstv %s41
    %v44 = vadd.f32 %v43, %v42
    %v45 = vsub.f32 %v44, %v36
    %s46 = sld [smem:[#allocation3 + $0x3]]
    %v47 = vmul.f32 %v34, %v45
    %v48 = vstv %s46
    %v49 = vadd.f32 %v48, %v47
    %v50 = vsub.f32 %v49, %v40
    %s51 = sld [smem:[#allocation3 + $0x2]]
    %v52 = vmul.f32 %v34, %v50
    %v53 = vstv %s51
    %v54 = vadd.f32 %v53, %v52
    %v55 = vsub.f32 %v54, %v45
    %s56 = sld [smem:[#allocation3 + $0x1]]
    %v57 = vmul.f32 %v34, %v55
    %v58 = vstv %s56
    %v59 = vadd.f32 %v58, %v57
    %v60 = vsub.f32 %v59, %v50
    %s61 = sld [smem:[#allocation3]]
    %v62 = vmul.f32 %v33, %v60
    %v63 = vstv %s61
    %v64 = vadd.f32 %v63, %v62
    %v65 = vsub.f32 %v64, %v55
    %v66 = vand.u32 2147483647, %v65
    %v67 = vmin.f32 %v66, 10.0
    %v68 = vsub.f32 0.0, %v67
    %v69 = vmul.f32 %v68, 1.442695
    %v70 = vpow.pop %v69
    %v71 = vadd.f32 %v70, 1e-06
    %72 = vst [vmem:[#allocation6] sm:$0x3] %v71
    // Predicated region
    $region18: #{universal_spectral_filter.1} parent=1 // pred_check
      _
    $region19: #{universal_spectral_filter.1} parent=1 // pred_check_branch
      %74 = sbr.rel (0) target = $region21
    $region20: #{universal_spectral_filter.1} parent=1 // pred_region
      %s76 = ssub.s32 32, 32
      %77 = vsyncadd [#allocation4], %s76
      %s79 = sshll.u32 [#allocation6], 4
      %s80 = int_to_ptr.vmem [resolvable:$true] %s79
      %82 = dma.vmem_to_hbm [thread:$0]  %s80, 32, %s3, [#allocation4]
    $region21: #{universal_spectral_filter.1} parent=1 // pred_fallthru
      _
    // Predicated region
    $region22: #{universal_spectral_filter.1} parent=1 // pred_check
      _
    $region23: #{universal_spectral_filter.1} parent=1 // pred_check_branch
      %84 = sbr.rel (0) target = $region25
    $region24: #{universal_spectral_filter.1} parent=1 // pred_region
      %85 = dma.done [#allocation4], 32
    $region25: #{universal_spectral_filter.1} parent=1 // pred_fallthru
      _
    %86 = vsyncpa [#allocation4], 1
    %87 = vsyncpa [#allocation5], 1

</llo_original>
